<compile_context>
chip_gen: v7x
topology: tpu7x:2x2x1
jax: 0.10.0
libtpu: 0.0.40
codegen_flags: <defaults>
</compile_context>

<pallas_src>
import jax
import jax.numpy as jnp
from jax import lax
from jax.experimental import pallas as pl
from jax.experimental.pallas import tpu as pltpu


def basic_block_kernel(x_ref, w1_ref, w2_ref, s1_ref, b1_ref, s2_ref, b2_ref,
                       o_ref):
    """One batch tile of NB images per grid step.

    x_ref : (NB, H+2, W*Cin)  f32  H-zero-padded input, (w, ci) flattened on lanes
    w*_ref: (3*W*Cin, W*Cout) bf16 banded im2col conv weights (W padding folded in)
    s*,b* : (1, W*Cout)       f32  folded BN scale / bias, tiled along W
    o_ref : (NB, H, W*Cout)   f32
    """
    NB, Hp2, WC = x_ref.shape
    H = Hp2 - 2
    M = NB * H

    # ---- conv1 + bn1 + relu : one lane-dense MXU matmul over the batch tile ----
    up1 = x_ref[:, 0:H, :].reshape(M, WC)
    mid = x_ref[:, 1:H + 1, :].reshape(M, WC)          # interior rows == residual
    dn1 = x_ref[:, 2:H + 2, :].reshape(M, WC)
    patch1 = jnp.concatenate(
        [up1.astype(jnp.bfloat16), mid.astype(jnp.bfloat16),
         dn1.astype(jnp.bfloat16)],
        axis=1)                                        # (M, 3*WC)
    acc1 = jnp.dot(patch1, w1_ref[...], preferred_element_type=jnp.float32)
    out1 = jnp.maximum(acc1 * s1_ref[...] + b1_ref[...], 0.0)   # (M, WC) f32

    # ---- conv2 + bn2 + relu : per-image H-halo = zero rows.  Build it with a
    # single global sublane shift, then mask the rows that crossed an image
    # boundary (row % H == 0 for the "up" shift, == H-1 for the "down" shift).
    zrow = jnp.zeros((1, WC), jnp.float32)
    up2 = jnp.concatenate([zrow, out1[:M - 1, :]], axis=0)      # row h-1 (global)
    dn2 = jnp.concatenate([out1[1:, :], zrow], axis=0)          # row h+1 (global)
    row = lax.broadcasted_iota(jnp.int32, (M, 1), 0) % H
    up2 = jnp.where(row == 0, 0.0, up2)
    dn2 = jnp.where(row == H - 1, 0.0, dn2)
    patch2 = jnp.concatenate(
        [up2.astype(jnp.bfloat16), out1.astype(jnp.bfloat16),
         dn2.astype(jnp.bfloat16)],
        axis=1)                                        # (M, 3*WC)
    acc2 = jnp.dot(patch2, w2_ref[...], preferred_element_type=jnp.float32)
    out2 = jnp.maximum(acc2 * s2_ref[...] + b2_ref[...], 0.0)

    # ---- residual add + final relu (f32), lane-dense store ----
    o_ref[...] = jnp.maximum(out2 + mid, 0.0).reshape(NB, H, WC).astype(o_ref.dtype)


def _banded_conv_weight(w_hwio, width):
    """(3, 3, Cin, Cout) HWIO 3x3 weights -> (3*width*Cin, width*Cout) matrix.

    Block-banded along W so that one matmul of an (rows, 3*W*Cin) row-im2col
    patch against it computes the full 3x3 conv for W output positions, with
    the W-direction zero padding encoded as zero blocks outside the band.
    """
    _, _, cin, cout = w_hwio.shape
    mats = []
    for kh in range(3):
        m = jnp.zeros((width, cin, width, cout), w_hwio.dtype)
        for kw in range(3):
            # nonzero where w_in = w_out + (kw - 1)  <=>  w_out = w_in + (1 - kw)
            diag = jnp.eye(width, k=1 - kw, dtype=w_hwio.dtype)
            m = m + diag[:, None, :, None] * w_hwio[kh, kw][None, :, None, :]
        mats.append(m.reshape(width * cin, width * cout))
    return jnp.concatenate(mats, axis=0)


def _pick_batch_tile(n, h):
    """Largest divisor of n with nb*h <= 256 (MXU-friendly M), at least 1."""
    target = max(1, 256 // max(h, 1))
    nb = 1
    for d in range(1, n + 1):
        if n % d == 0 and d <= target:
            nb = d
    return nb


@jax.jit
def basic_block_forward(x, w1, gamma1, beta1, mean1, var1,
                        w2, gamma2, beta2, mean2, var2):
    """x: (N, H, W, Cin) NHWC f32.  w1: (3,3,Cin,Cout), w2: (3,3,Cout,Cout) HWIO."""
    N, H, W, Cin = x.shape
    Cout = w1.shape[-1]
    assert Cin == Cout, "residual path without downsample requires Cin == Cout"
    eps = 1e-5

    # Fold eval-mode BatchNorm into per-channel scale/bias, tiled to W*C lanes.
    s1 = gamma1 / jnp.sqrt(var1 + eps)
    b1 = beta1 - mean1 * s1
    s2 = gamma2 / jnp.sqrt(var2 + eps)
    b2 = beta2 - mean2 * s2
    s1t = jnp.tile(s1, W).reshape(1, W * Cout)
    b1t = jnp.tile(b1, W).reshape(1, W * Cout)
    s2t = jnp.tile(s2, W).reshape(1, W * Cout)
    b2t = jnp.tile(b2, W).reshape(1, W * Cout)

    # Pad only along H; W padding is folded into the banded weights.
    xrows = jnp.pad(x, ((0, 0), (1, 1), (0, 0), (0, 0))).reshape(N, H + 2, W * Cin)
    w1b = _banded_conv_weight(w1, W).astype(jnp.bfloat16)   # (3*W*Cin, W*Cout)
    w2b = _banded_conv_weight(w2, W).astype(jnp.bfloat16)   # (3*W*Cout, W*Cout)

    NB = _pick_batch_tile(N, H)

    full = lambda n: (0, 0)
    out = pl.pallas_call(
        basic_block_kernel,
        out_shape=jax.ShapeDtypeStruct((N, H, W * Cout), jnp.float32),
        grid_spec=pltpu.PrefetchScalarGridSpec(
            num_scalar_prefetch=0,
            grid=(N // NB,),
            in_specs=[
                pl.BlockSpec((NB, H + 2, W * Cin), lambda n: (n, 0, 0)),
                pl.BlockSpec((3 * W * Cin, W * Cout), full),
                pl.BlockSpec((3 * W * Cout, W * Cout), full),
                pl.BlockSpec((1, W * Cout), full),
                pl.BlockSpec((1, W * Cout), full),
                pl.BlockSpec((1, W * Cout), full),
                pl.BlockSpec((1, W * Cout), full),
            ],
            out_specs=pl.BlockSpec((NB, H, W * Cout), lambda n: (n, 0, 0)),
        ),
        compiler_params=pltpu.CompilerParams(
            dimension_semantics=("parallel",)),
    )(xrows, w1b, w2b, s1t, b1t, s2t, b2t)
    return out.reshape(N, H, W, Cout)


def _reference_forward(x, w1, gamma1, beta1, mean1, var1,
                       w2, gamma2, beta2, mean2, var2, *,
                       matmul_dtype=jnp.float32):
    """Pure-JAX reference; matmul_dtype controls the conv operand precision."""
    eps = 1e-5
    dn = ("NHWC", "HWIO", "NHWC")

    def conv(a, w):
        return lax.conv_general_dilated(
            a.astype(matmul_dtype), w.astype(matmul_dtype),
            window_strides=(1, 1), padding=((1, 1), (1, 1)),
            dimension_numbers=dn, precision=lax.Precision.HIGHEST,
            preferred_element_type=jnp.float32)

    def bn(a, g, b, m, v):
        return (a - m) / jnp.sqrt(v + eps) * g + b

    out = jax.nn.relu(bn(conv(x, w1), gamma1, beta1, mean1, var1))
    out = jax.nn.relu(bn(conv(out, w2), gamma2, beta2, mean2, var2))
    return jax.nn.relu(out + x)


if __name__ == "__main__":
    # Small shapes consistent with the module; W * C = 128 -> lane-dense last dim.
    N, H, W, C = 2, 16, 16, 8

    key = jax.random.PRNGKey(0)
    keys = jax.random.split(key, 11)
    x = jax.random.normal(keys[0], (N, H, W, C), jnp.float32)
    w1 = jax.random.normal(keys[1], (3, 3, C, C), jnp.float32) * 0.1
    w2 = jax.random.normal(keys[2], (3, 3, C, C), jnp.float32) * 0.1
    gamma1 = 1.0 + 0.1 * jax.random.normal(keys[3], (C,), jnp.float32)
    gamma2 = 1.0 + 0.1 * jax.random.normal(keys[4], (C,), jnp.float32)
    beta1 = 0.1 * jax.random.normal(keys[5], (C,), jnp.float32)
    beta2 = 0.1 * jax.random.normal(keys[6], (C,), jnp.float32)
    mean1 = 0.1 * jax.random.normal(keys[7], (C,), jnp.float32)
    mean2 = 0.1 * jax.random.normal(keys[8], (C,), jnp.float32)
    var1 = 1.0 + 0.1 * jnp.abs(jax.random.normal(keys[9], (C,), jnp.float32))
    var2 = 1.0 + 0.1 * jnp.abs(jax.random.normal(keys[10], (C,), jnp.float32))

    args = (x, w1, gamma1, beta1, mean1, var1, w2, gamma2, beta2, mean2, var2)

    out = jax.block_until_ready(basic_block_forward(*args))
    assert out.shape == (N, H, W, C)

    # Tight check vs a reference using the same bf16 conv operands (f32 accum).
    ref_bf16 = _reference_forward(*args, matmul_dtype=jnp.bfloat16)
    assert jnp.allclose(out, ref_bf16, rtol=5e-3, atol=5e-3), \
        "mismatch vs bf16-matched JAX reference"

    # Loose sanity check vs the full-f32 reference (only conv operands are bf16).
    ref_f32 = _reference_forward(*args, matmul_dtype=jnp.float32)
    assert jnp.allclose(out, ref_f32, rtol=5e-2, atol=5e-2), \
        "mismatch vs f32 JAX reference"

    print("KERNEL_OK")
</pallas_src>

<mosaic_0001>
module attributes {stable_mosaic.version = 11 : i64} {
  func.func @basic_block_kernel(%arg0: i32, %arg1: memref<2x18x128xf32, #tpu.memory_space<vmem>>, %arg2: memref<384x128xbf16, #tpu.memory_space<vmem>>, %arg3: memref<384x128xbf16, #tpu.memory_space<vmem>>, %arg4: memref<1x128xf32, #tpu.memory_space<vmem>>, %arg5: memref<1x128xf32, #tpu.memory_space<vmem>>, %arg6: memref<1x128xf32, #tpu.memory_space<vmem>>, %arg7: memref<1x128xf32, #tpu.memory_space<vmem>>, %arg8: memref<2x16x128xf32, #tpu.memory_space<vmem>>) attributes {dimension_semantics = [#tpu.dimension_semantics<parallel>], iteration_bounds = array<i64: 1>, scalar_prefetch = 0 : i64, scratch_operands = 0 : i64, tpu.core_type = #tpu.core_type<tc>, window_params = [{transform_indices = @transform_0, window_bounds = array<i64: 2, 18, 128>}, {pipeline_mode = #tpu.pipeline_mode<synchronous>, transform_indices = @transform_1, window_bounds = array<i64: 384, 128>}, {pipeline_mode = #tpu.pipeline_mode<synchronous>, transform_indices = @transform_2, window_bounds = array<i64: 384, 128>}, {pipeline_mode = #tpu.pipeline_mode<synchronous>, transform_indices = @transform_3, window_bounds = array<i64: 1, 128>}, {pipeline_mode = #tpu.pipeline_mode<synchronous>, transform_indices = @transform_4, window_bounds = array<i64: 1, 128>}, {pipeline_mode = #tpu.pipeline_mode<synchronous>, transform_indices = @transform_5, window_bounds = array<i64: 1, 128>}, {pipeline_mode = #tpu.pipeline_mode<synchronous>, transform_indices = @transform_6, window_bounds = array<i64: 1, 128>}, {transform_indices = @transform_7, window_bounds = array<i64: 2, 16, 128>}]} {
    %c0 = arith.constant 0 : index
    %c0_0 = arith.constant 0 : index
    %c0_1 = arith.constant 0 : index
    %0 = vector.load %arg1[%c0, %c0_0, %c0_1] : memref<2x18x128xf32, #tpu.memory_space<vmem>>, vector<2x16x128xf32>
    %1 = vector.shape_cast %0 : vector<2x16x128xf32> to vector<32x128xf32>
    %c0_2 = arith.constant 0 : index
    %c1 = arith.constant 1 : index
    %c0_3 = arith.constant 0 : index
    %2 = vector.load %arg1[%c0_2, %c1, %c0_3] : memref<2x18x128xf32, #tpu.memory_space<vmem>>, vector<2x16x128xf32>
    %3 = vector.shape_cast %2 : vector<2x16x128xf32> to vector<32x128xf32>
    %c0_4 = arith.constant 0 : index
    %c2 = arith.constant 2 : index
    %c0_5 = arith.constant 0 : index
    %4 = vector.load %arg1[%c0_4, %c2, %c0_5] : memref<2x18x128xf32, #tpu.memory_space<vmem>>, vector<2x16x128xf32>
    %5 = vector.shape_cast %4 : vector<2x16x128xf32> to vector<32x128xf32>
    %6 = arith.truncf %1 : vector<32x128xf32> to vector<32x128xbf16>
    %7 = arith.truncf %3 : vector<32x128xf32> to vector<32x128xbf16>
    %8 = arith.truncf %5 : vector<32x128xf32> to vector<32x128xbf16>
    %9 = tpu.concatenate %6, %7, %8 in 1 : vector<32x128xbf16>, vector<32x128xbf16>, vector<32x128xbf16> -> vector<32x384xbf16>
    %c0_6 = arith.constant 0 : index
    %c0_7 = arith.constant 0 : index
    %10 = vector.load %arg2[%c0_6, %c0_7] : memref<384x128xbf16, #tpu.memory_space<vmem>>, vector<384x128xbf16>
    %cst = arith.constant dense<0.000000e+00> : vector<32x128xf32>
    %11 = tpu.matmul %9, %10, %cst {dimension_numbers = #tpu.dot_dimension_numbers<[1], [0], [0], [1], [0, 0, 1, 1], [], []>} : vector<32x384xbf16>, vector<384x128xbf16>, vector<32x128xf32> -> vector<32x128xf32>
    %c0_8 = arith.constant 0 : index
    %c0_9 = arith.constant 0 : index
    %12 = vector.load %arg4[%c0_8, %c0_9] : memref<1x128xf32, #tpu.memory_space<vmem>>, vector<1x128xf32>
    %13 = vector.broadcast %12 : vector<1x128xf32> to vector<32x128xf32>
    %14 = arith.mulf %11, %13 : vector<32x128xf32>
    %c0_10 = arith.constant 0 : index
    %c0_11 = arith.constant 0 : index
    %15 = vector.load %arg5[%c0_10, %c0_11] : memref<1x128xf32, #tpu.memory_space<vmem>>, vector<1x128xf32>
    %16 = vector.broadcast %15 : vector<1x128xf32> to vector<32x128xf32>
    %17 = arith.addf %14, %16 : vector<32x128xf32>
    %cst_12 = arith.constant 0.000000e+00 : f32
    %18 = vector.broadcast %cst_12 : f32 to vector<32x128xf32>
    %19 = arith.maximumf %17, %18 : vector<32x128xf32>
    %cst_13 = arith.constant 0.000000e+00 : f32
    %20 = vector.broadcast %cst_13 : f32 to vector<1x128xf32>
    %21 = vector.extract_strided_slice %19 {offsets = [0, 0], sizes = [31, 128], strides = [1, 1]} : vector<32x128xf32> to vector<31x128xf32>
    %22 = tpu.concatenate %20, %21 in 0 : vector<1x128xf32>, vector<31x128xf32> -> vector<32x128xf32>
    %23 = vector.extract_strided_slice %19 {offsets = [1, 0], sizes = [31, 128], strides = [1, 1]} : vector<32x128xf32> to vector<31x128xf32>
    %24 = tpu.concatenate %23, %20 in 0 : vector<31x128xf32>, vector<1x128xf32> -> vector<32x128xf32>
    %25 = tpu.iota {dimensions = array<i32: 0>} : vector<32x1xi32>
    %c16_i32 = arith.constant 16 : i32
    %c0_i32 = arith.constant 0 : i32
    %26 = arith.cmpi eq, %c16_i32, %c0_i32 : i32
    %c1_i32 = arith.constant 1 : i32
    %27 = arith.select %26, %c1_i32, %c16_i32 : i32
    %28 = vector.broadcast %27 : i32 to vector<32x1xi32>
    %29 = arith.remsi %25, %28 : vector<32x1xi32>
    %c0_i32_14 = arith.constant 0 : i32
    %30 = vector.broadcast %c0_i32_14 : i32 to vector<32x1xi32>
    %31 = arith.cmpi ne, %29, %30 : vector<32x1xi32>
    %c0_i32_15 = arith.constant 0 : i32
    %32 = vector.broadcast %c0_i32_15 : i32 to vector<32x1xi32>
    %33 = arith.cmpi slt, %29, %32 : vector<32x1xi32>
    %c0_i32_16 = arith.constant 0 : i32
    %34 = arith.cmpi slt, %27, %c0_i32_16 : i32
    %35 = vector.broadcast %34 : i1 to vector<32x1xi1>
    %36 = vector.broadcast %35 : vector<32x1xi1> to vector<32x1xi1>
    %37 = arith.xori %33, %36 : vector<32x1xi1>
    %38 = arith.andi %37, %31 : vector<32x1xi1>
    %39 = vector.broadcast %27 : i32 to vector<32x1xi32>
    %40 = arith.addi %29, %39 : vector<32x1xi32>
    %41 = arith.select %38, %40, %29 : vector<32x1xi1>, vector<32x1xi32>
    %c0_i32_17 = arith.constant 0 : i32
    %42 = vector.broadcast %c0_i32_17 : i32 to vector<32x1xi32>
    %43 = arith.cmpi eq, %41, %42 : vector<32x1xi32>
    %cst_18 = arith.constant 0.000000e+00 : f32
    %44 = vector.shape_cast %43 : vector<32x1xi1> to vector<32x1xi1>
    %45 = vector.broadcast %44 : vector<32x1xi1> to vector<32x128xi1>
    %46 = vector.broadcast %cst_18 : f32 to vector<32x128xf32>
    %47 = arith.select %45, %46, %22 : vector<32x128xi1>, vector<32x128xf32>
    %c15_i32 = arith.constant 15 : i32
    %48 = vector.broadcast %c15_i32 : i32 to vector<32x1xi32>
    %49 = arith.cmpi eq, %41, %48 : vector<32x1xi32>
    %cst_19 = arith.constant 0.000000e+00 : f32
    %50 = vector.shape_cast %49 : vector<32x1xi1> to vector<32x1xi1>
    %51 = vector.broadcast %50 : vector<32x1xi1> to vector<32x128xi1>
    %52 = vector.broadcast %cst_19 : f32 to vector<32x128xf32>
    %53 = arith.select %51, %52, %24 : vector<32x128xi1>, vector<32x128xf32>
    %54 = arith.truncf %47 : vector<32x128xf32> to vector<32x128xbf16>
    %55 = arith.truncf %19 : vector<32x128xf32> to vector<32x128xbf16>
    %56 = arith.truncf %53 : vector<32x128xf32> to vector<32x128xbf16>
    %57 = tpu.concatenate %54, %55, %56 in 1 : vector<32x128xbf16>, vector<32x128xbf16>, vector<32x128xbf16> -> vector<32x384xbf16>
    %c0_20 = arith.constant 0 : index
    %c0_21 = arith.constant 0 : index
    %58 = vector.load %arg3[%c0_20, %c0_21] : memref<384x128xbf16, #tpu.memory_space<vmem>>, vector<384x128xbf16>
    %cst_22 = arith.constant dense<0.000000e+00> : vector<32x128xf32>
    %59 = tpu.matmul %57, %58, %cst_22 {dimension_numbers = #tpu.dot_dimension_numbers<[1], [0], [0], [1], [0, 0, 1, 1], [], []>} : vector<32x384xbf16>, vector<384x128xbf16>, vector<32x128xf32> -> vector<32x128xf32>
    %c0_23 = arith.constant 0 : index
    %c0_24 = arith.constant 0 : index
    %60 = vector.load %arg6[%c0_23, %c0_24] : memref<1x128xf32, #tpu.memory_space<vmem>>, vector<1x128xf32>
    %61 = vector.broadcast %60 : vector<1x128xf32> to vector<32x128xf32>
    %62 = arith.mulf %59, %61 : vector<32x128xf32>
    %c0_25 = arith.constant 0 : index
    %c0_26 = arith.constant 0 : index
    %63 = vector.load %arg7[%c0_25, %c0_26] : memref<1x128xf32, #tpu.memory_space<vmem>>, vector<1x128xf32>
    %64 = vector.broadcast %63 : vector<1x128xf32> to vector<32x128xf32>
    %65 = arith.addf %62, %64 : vector<32x128xf32>
    %cst_27 = arith.constant 0.000000e+00 : f32
    %66 = vector.broadcast %cst_27 : f32 to vector<32x128xf32>
    %67 = arith.maximumf %65, %66 : vector<32x128xf32>
    %68 = arith.addf %67, %3 : vector<32x128xf32>
    %cst_28 = arith.constant 0.000000e+00 : f32
    %69 = vector.broadcast %cst_28 : f32 to vector<32x128xf32>
    %70 = arith.maximumf %68, %69 : vector<32x128xf32>
    %71 = vector.shape_cast %70 : vector<32x128xf32> to vector<2x16x128xf32>
    %c0_29 = arith.constant 0 : index
    %c0_30 = arith.constant 0 : index
    %c0_31 = arith.constant 0 : index
    %72 = vector.load %arg8[%c0_29, %c0_30, %c0_31] : memref<2x16x128xf32, #tpu.memory_space<vmem>>, vector<2x16x128xf32>
    tpu.vector_store %arg8[%c0_29, %c0_30, %c0_31], %71 {strides = array<i32>} : memref<2x16x128xf32, #tpu.memory_space<vmem>>, vector<2x16x128xf32>,
    return
  }
  func.func @transform_0(%arg0: i32) -> (i32, i32, i32) {
    %c0_i32 = arith.constant 0 : i32
    %c0_i32_0 = arith.constant 0 : i32
    %c0_i32_1 = arith.constant 0 : i32
    return %arg0, %c0_i32, %c0_i32_0 : i32, i32, i32
  }
  func.func @transform_1(%arg0: i32) -> (i32, i32) {
    %c0_i32 = arith.constant 0 : i32
    %c0_i32_0 = arith.constant 0 : i32
    %c0_i32_1 = arith.constant 0 : i32
    return %c0_i32, %c0_i32_0 : i32, i32
  }
  func.func @transform_2(%arg0: i32) -> (i32, i32) {
    %c0_i32 = arith.constant 0 : i32
    %c0_i32_0 = arith.constant 0 : i32
    %c0_i32_1 = arith.constant 0 : i32
    return %c0_i32, %c0_i32_0 : i32, i32
  }
  func.func @transform_3(%arg0: i32) -> (i32, i32) {
    %c0_i32 = arith.constant 0 : i32
    %c0_i32_0 = arith.constant 0 : i32
    %c0_i32_1 = arith.constant 0 : i32
    return %c0_i32, %c0_i32_0 : i32, i32
  }
  func.func @transform_4(%arg0: i32) -> (i32, i32) {
    %c0_i32 = arith.constant 0 : i32
    %c0_i32_0 = arith.constant 0 : i32
    %c0_i32_1 = arith.constant 0 : i32
    return %c0_i32, %c0_i32_0 : i32, i32
  }
  func.func @transform_5(%arg0: i32) -> (i32, i32) {
    %c0_i32 = arith.constant 0 : i32
    %c0_i32_0 = arith.constant 0 : i32
    %c0_i32_1 = arith.constant 0 : i32
    return %c0_i32, %c0_i32_0 : i32, i32
  }
  func.func @transform_6(%arg0: i32) -> (i32, i32) {
    %c0_i32 = arith.constant 0 : i32
    %c0_i32_0 = arith.constant 0 : i32
    %c0_i32_1 = arith.constant 0 : i32
    return %c0_i32, %c0_i32_0 : i32, i32
  }
  func.func @transform_7(%arg0: i32) -> (i32, i32, i32) {
    %c0_i32 = arith.constant 0 : i32
    %c0_i32_0 = arith.constant 0 : i32
    %c0_i32_1 = arith.constant 0 : i32
    return %arg0, %c0_i32, %c0_i32_0 : i32, i32, i32
  }
}

</mosaic_0001>

<llo_original>
// kernel: tile.23
$region0: #{tile.23}
  #allocation0 [shape = 's32[1]{0}', space=sflag, size = 0x4, scoped, tag = 'scoped memory for tile.23']
  %s0 = inlined_call_operand.vmem [shape: f32[8], index: 0, kind: input, shape index: {}]
  %s1 = inlined_call_operand.vmem [shape: f32[16,8], index: 1, kind: output, shape index: {}]
  // Predicated region
  $region2: #{tile.23} parent=0 // pred_check
    _
  $region3: #{tile.23} parent=0 // pred_check_branch
    %3 = sbr.rel (0) target = $region5
  $region4: #{tile.23} parent=0 // pred_region
    _
  $region5: #{tile.23} parent=0 // pred_fallthru
    _
  %v4 = vld [vmem:[%s0] ss:$0 sm:$0xff]
  %5 = vst [vmem:[%s1] sm:$0xff] %v4
  %s6 = scalar_lea.vmem %s1, 8
  %7 = vst [vmem:[%s6] sm:$0xff] %v4

// kernel: tile.24
$region0: #{tile.24}
  %s0 = inlined_call_operand.vmem [shape: f32[16,8], index: 0, kind: input, shape index: {}]
  %s1 = inlined_call_operand.vmem [shape: f32[1,128], index: 1, kind: output, shape index: {}]
  $region1: #{tile.24} parent=0
    #allocation0 [shape = 'u8[4096]{0}', space=vmem, size = 0x1000, scoped, tag = 'scoped mem for output reshape']
    %v2 = vld [vmem:[%s0] sm:$0x1]
    %vm3 = vcmask 64512
    %4 = vst.msk [vmem:[#allocation0] sm:$0x1] %vm3, %v2
    %s5 = scalar_lea.vmem %s0, 15
    %v6 = vld [vmem:[%s5] sm:$0x1]
    %7 = vrot.lane.b32.xlu0 %v6, 120
    %v8 = vpop.permute.xlu0 %7
    %vm9 = vcmask 1048512
    %10 = vst.msk [vmem:[#allocation0] sm:$0x1] %vm9, %v8
    %s11 = scalar_lea.vmem %s0, 14
    %v12 = vld [vmem:[%s11] sm:$0x1]
    %13 = vrot.lane.b32.xlu0 %v12, 112
    %v14 = vpop.permute.xlu0 %13
    %vm15 = vcmask 982912
    %16 = vst.msk [vmem:[#allocation0] sm:$0x1] %vm15, %v14
    %s17 = scalar_lea.vmem %s0, 13
    %v18 = vld [vmem:[%s17] sm:$0x1]
    %19 = vrot.lane.b32.xlu0 %v18, 104
    %v20 = vpop.permute.xlu0 %19
    %vm21 = vcmask 917312
    %22 = vst.msk [vmem:[#allocation0] sm:$0x1] %vm21, %v20
    %s23 = scalar_lea.vmem %s0, 12
    %v24 = vld [vmem:[%s23] sm:$0x1]
    %25 = vrot.lane.b32.xlu0 %v24, 96
    %v26 = vpop.permute.xlu0 %25
    %vm27 = vcmask 851712
    %28 = vst.msk [vmem:[#allocation0] sm:$0x1] %vm27, %v26
    %s29 = scalar_lea.vmem %s0, 11
    %v30 = vld [vmem:[%s29] sm:$0x1]
    %31 = vrot.lane.b32.xlu0 %v30, 88
    %v32 = vpop.permute.xlu0 %31
    %vm33 = vcmask 786112
    %34 = vst.msk [vmem:[#allocation0] sm:$0x1] %vm33, %v32
    %s35 = scalar_lea.vmem %s0, 10
    %v36 = vld [vmem:[%s35] sm:$0x1]
    %37 = vrot.lane.b32.xlu0 %v36, 80
    %v38 = vpop.permute.xlu0 %37
    %vm39 = vcmask 720512
    %40 = vst.msk [vmem:[#allocation0] sm:$0x1] %vm39, %v38
    %s41 = scalar_lea.vmem %s0, 9
    %v42 = vld [vmem:[%s41] sm:$0x1]
    %43 = vrot.lane.b32.xlu0 %v42, 72
    %v44 = vpop.permute.xlu0 %43
    %vm45 = vcmask 654912
    %46 = vst.msk [vmem:[#allocation0] sm:$0x1] %vm45, %v44
    %s47 = scalar_lea.vmem %s0, 8
    %v48 = vld [vmem:[%s47] sm:$0x1]
    %49 = vrot.lane.b32.xlu0 %v48, 64
    %v50 = vpop.permute.xlu0 %49
    %vm51 = vcmask 589312
    %52 = vst.msk [vmem:[#allocation0] sm:$0x1] %vm51, %v50
    %s53 = scalar_lea.vmem %s0, 7
    %v54 = vld [vmem:[%s53] sm:$0x1]
    %55 = vrot.lane.b32.xlu0 %v54, 56
    %v56 = vpop.permute.xlu0 %55
    %vm57 = vcmask 523712
    %58 = vst.msk [vmem:[#allocation0] sm:$0x1] %vm57, %v56
    %s59 = scalar_lea.vmem %s0, 6
    %v60 = vld [vmem:[%s59] sm:$0x1]
    %61 = vrot.lane.b32.xlu0 %v60, 48
    %v62 = vpop.permute.xlu0 %61
    %vm63 = vcmask 458112
    %64 = vst.msk [vmem:[#allocation0] sm:$0x1] %vm63, %v62
    %s65 = scalar_lea.vmem %s0, 5
    %v66 = vld [vmem:[%s65] sm:$0x1]
    %67 = vrot.lane.b32.xlu0 %v66, 40
    %v68 = vpop.permute.xlu0 %67
    %vm69 = vcmask 392512
    %70 = vst.msk [vmem:[#allocation0] sm:$0x1] %vm69, %v68
    %s71 = scalar_lea.vmem %s0, 4
    %v72 = vld [vmem:[%s71] sm:$0x1]
    %73 = vrot.lane.b32.xlu0 %v72, 32
    %v74 = vpop.permute.xlu0 %73
    %vm75 = vcmask 326912
    %76 = vst.msk [vmem:[#allocation0] sm:$0x1] %vm75, %v74
    %s77 = scalar_lea.vmem %s0, 3
    %v78 = vld [vmem:[%s77] sm:$0x1]
    %79 = vrot.lane.b32.xlu0 %v78, 24
    %v80 = vpop.permute.xlu0 %79
    %vm81 = vcmask 261312
    %82 = vst.msk [vmem:[#allocation0] sm:$0x1] %vm81, %v80
    %s83 = scalar_lea.vmem %s0, 2
    %v84 = vld [vmem:[%s83] sm:$0x1]
    %85 = vrot.lane.b32.xlu0 %v84, 16
    %v86 = vpop.permute.xlu0 %85
    %vm87 = vcmask 195712
    %88 = vst.msk [vmem:[#allocation0] sm:$0x1] %vm87, %v86
    %s89 = scalar_lea.vmem %s0, 1
    %v90 = vld [vmem:[%s89] sm:$0x1]
    %91 = vrot.lane.b32.xlu0 %v90, 8
    %v92 = vpop.permute.xlu0 %91
    %vm93 = vcmask 130112
    %94 = vst.msk [vmem:[#allocation0] sm:$0x1] %vm93, %v92
    %s96 = sshllo.u32 0, 1
    %v98 = vld [vmem:[#allocation0] sm:%s96]
    %s99 = sshllo.u32 0, 1
    %100 = vst [vmem:[%s1] sm:%s99] %v98

// kernel: basic_block_forward.1
$region0: #{basic_block_forward.1}
  #allocation0 [shape = 'u32[]', space=smem, size = 0x4, offset = 0x4, fixed_abs, tag = 'smem constant byte address 0x4 - core index']
  #allocation1 [shape = 'u32[144,128]{1,0:T(1,128)}', space=vmem, size = 0x12000, scoped, tag = 'internal scratch']
  %s0 = inlined_call_operand.vmem [shape: f32[2,18,128], index: 0, kind: input, shape index: {}]
  %s1 = inlined_call_operand.vmem [shape: bf16[384,128], index: 1, kind: input, shape index: {}]
  %s2 = inlined_call_operand.vmem [shape: bf16[384,128], index: 2, kind: input, shape index: {}]
  %s3 = inlined_call_operand.vmem [shape: f32[1,128], index: 3, kind: input, shape index: {}]
  %s4 = inlined_call_operand.vmem [shape: f32[1,128], index: 4, kind: input, shape index: {}]
  %s5 = inlined_call_operand.vmem [shape: f32[1,128], index: 5, kind: input, shape index: {}]
  %s6 = inlined_call_operand.vmem [shape: f32[1,128], index: 6, kind: input, shape index: {}]
  %s7 = inlined_call_operand.vmem [shape: f32[2,16,128], index: 7, kind: output, shape index: {}]
  %s8 = sld [smem:[#allocation0]]
  $region38: #{basic_block_forward.1} parent=0
    _
  %s10 = ssub.s32 1, %s8
  %s11 = scalar_select 0, %s10, %s8
  // Predicated region
  $region2: #{basic_block_forward.1} parent=0 // pred_check
    _
  $region3: #{basic_block_forward.1} parent=0 // pred_check_branch
    %13 = sbr.rel (0) target = $region5
  $region4: #{basic_block_forward.1} parent=0 // pred_region
    _
  $region5: #{basic_block_forward.1} parent=0 // pred_fallthru
    _
  // Predicated region
  $region6: #{basic_block_forward.1} parent=0 // pred_check
    _
  $region7: #{basic_block_forward.1} parent=0 // pred_check_branch
    %15 = sbr.rel (0) target = $region9
  $region8: #{basic_block_forward.1} parent=0 // pred_region
    _
  $region9: #{basic_block_forward.1} parent=0 // pred_fallthru
    _
  // Predicated region
  $region10: #{basic_block_forward.1} parent=0 // pred_check
    _
  $region11: #{basic_block_forward.1} parent=0 // pred_check_branch
    %17 = sbr.rel (0) target = $region13
  $region12: #{basic_block_forward.1} parent=0 // pred_region
    _
  $region13: #{basic_block_forward.1} parent=0 // pred_fallthru
    _
  // Predicated region
  $region14: #{basic_block_forward.1} parent=0 // pred_check
    _
  $region15: #{basic_block_forward.1} parent=0 // pred_check_branch
    %19 = sbr.rel (0) target = $region17
  $region16: #{basic_block_forward.1} parent=0 // pred_region
    _
  $region17: #{basic_block_forward.1} parent=0 // pred_fallthru
    _
  // Predicated region
  $region18: #{basic_block_forward.1} parent=0 // pred_check
    _
  $region19: #{basic_block_forward.1} parent=0 // pred_check_branch
    %21 = sbr.rel (0) target = $region21
  $region20: #{basic_block_forward.1} parent=0 // pred_region
    _
  $region21: #{basic_block_forward.1} parent=0 // pred_fallthru
    _
  // Predicated region
  $region22: #{basic_block_forward.1} parent=0 // pred_check
    _
  $region23: #{basic_block_forward.1} parent=0 // pred_check_branch
    %23 = sbr.rel (0) target = $region25
  $region24: #{basic_block_forward.1} parent=0 // pred_region
    _
  $region25: #{basic_block_forward.1} parent=0 // pred_fallthru
    _
  // Predicated region
  $region26: #{basic_block_forward.1} parent=0 // pred_check
    _
  $region27: #{basic_block_forward.1} parent=0 // pred_check_branch
    %25 = sbr.rel (0) target = $region29
  $region28: #{basic_block_forward.1} parent=0 // pred_region
    _
  $region29: #{basic_block_forward.1} parent=0 // pred_fallthru
    _
  %v27 = vld [vmem:[%s0] sm:$0xff]
  %v28 = vld [vmem:[%s0 + $0x8] sm:$0xff]
  %v29 = vld [vmem:[%s0 + $0x18] sm:$0xff]
  %v30 = vld [vmem:[%s0 + $0x20] sm:$0xff]
  %v31 = vld [vmem:[%s0 + $0x1] sm:$0xff]
  %v32 = vld [vmem:[%s0 + $0x9] sm:$0xff]
  %v33 = vld [vmem:[%s0 + $0x19] sm:$0xff]
  %v34 = vld [vmem:[%s0 + $0x21] sm:$0xff]
  %v35 = vld [vmem:[%s0 + $0x2] sm:$0xff]
  %v36 = vld [vmem:[%s0 + $0xa] sm:$0xff]
  %v37 = vld [vmem:[%s0 + $0x1a] sm:$0xff]
  %v38 = vld [vmem:[%s0 + $0x22] sm:$0xff]
  %v39 = vpack.c.bf16 %v28, %v27
  %v40 = vpack.c.bf16 %v30, %v29
  %v41 = vpack.c.bf16 %v32, %v31
  %v42 = vpack.c.bf16 %v34, %v33
  %v43 = vpack.c.bf16 %v36, %v35
  %v44 = vpack.c.bf16 %v38, %v37
  %v45 = vld [vmem:[%s1] sm:$0xf]
  %v46 = vld [vmem:[%s1 + $0x4] sm:$0xf]
  %v47 = vld [vmem:[%s1 + $0x8] sm:$0xf]
  %v48 = vld [vmem:[%s1 + $0xc] sm:$0xf]
  %v49 = vld [vmem:[%s1 + $0x10] sm:$0xf]
  %v50 = vld [vmem:[%s1 + $0x14] sm:$0xf]
  %v51 = vld [vmem:[%s1 + $0x18] sm:$0xf]
  %v52 = vld [vmem:[%s1 + $0x1c] sm:$0xf]
  %v53 = vld [vmem:[%s1 + $0x20] sm:$0xf]
  %v54 = vld [vmem:[%s1 + $0x24] sm:$0xf]
  %v55 = vld [vmem:[%s1 + $0x28] sm:$0xf]
  %v56 = vld [vmem:[%s1 + $0x2c] sm:$0xf]
  %v57 = vld [vmem:[%s1 + $0x30] sm:$0xf]
  %v58 = vld [vmem:[%s1 + $0x34] sm:$0xf]
  %v59 = vld [vmem:[%s1 + $0x38] sm:$0xf]
  %v60 = vld [vmem:[%s1 + $0x3c] sm:$0xf]
  %v61 = vld [vmem:[%s1 + $0x40] sm:$0xf]
  %v62 = vld [vmem:[%s1 + $0x44] sm:$0xf]
  %v63 = vld [vmem:[%s1 + $0x48] sm:$0xf]
  %v64 = vld [vmem:[%s1 + $0x4c] sm:$0xf]
  %v65 = vld [vmem:[%s1 + $0x50] sm:$0xf]
  %v66 = vld [vmem:[%s1 + $0x54] sm:$0xf]
  %v67 = vld [vmem:[%s1 + $0x58] sm:$0xf]
  %v68 = vld [vmem:[%s1 + $0x5c] sm:$0xf]
  %v69 = vld [vmem:[%s1 + $0x60] sm:$0xf]
  %v70 = vld [vmem:[%s1 + $0x64] sm:$0xf]
  %v71 = vld [vmem:[%s1 + $0x68] sm:$0xf]
  %v72 = vld [vmem:[%s1 + $0x6c] sm:$0xf]
  %v73 = vld [vmem:[%s1 + $0x70] sm:$0xf]
  %v74 = vld [vmem:[%s1 + $0x74] sm:$0xf]
  %v75 = vld [vmem:[%s1 + $0x78] sm:$0xf]
  %v76 = vld [vmem:[%s1 + $0x7c] sm:$0xf]
  %v77 = vld [vmem:[%s1 + $0x80] sm:$0xf]
  %v78 = vld [vmem:[%s1 + $0x84] sm:$0xf]
  %v79 = vld [vmem:[%s1 + $0x88] sm:$0xf]
  %v80 = vld [vmem:[%s1 + $0x8c] sm:$0xf]
  %v81 = vld [vmem:[%s1 + $0x90] sm:$0xf]
  %v82 = vld [vmem:[%s1 + $0x94] sm:$0xf]
  %v83 = vld [vmem:[%s1 + $0x98] sm:$0xf]
  %v84 = vld [vmem:[%s1 + $0x9c] sm:$0xf]
  %v85 = vld [vmem:[%s1 + $0xa0] sm:$0xf]
  %v86 = vld [vmem:[%s1 + $0xa4] sm:$0xf]
  %v87 = vld [vmem:[%s1 + $0xa8] sm:$0xf]
  %v88 = vld [vmem:[%s1 + $0xac] sm:$0xf]
  %v89 = vld [vmem:[%s1 + $0xb0] sm:$0xf]
  %v90 = vld [vmem:[%s1 + $0xb4] sm:$0xf]
  %v91 = vld [vmem:[%s1 + $0xb8] sm:$0xf]
  %v92 = vld [vmem:[%s1 + $0xbc] sm:$0xf]
  %v141 = vunpack.c.l.b16 %v45
  %v142 = vunpack.c.l.b16 %v46
  %v143 = vunpack.c.l.b16 %v47
  %v144 = vunpack.c.l.b16 %v48
  %v145 = vunpack.c.l.b16 %v49
  %v146 = vunpack.c.l.b16 %v50
  %v147 = vunpack.c.l.b16 %v51
  %v148 = vunpack.c.l.b16 %v52
  %v149 = vunpack.c.l.b16 %v53
  %v150 = vunpack.c.l.b16 %v54
  %v151 = vunpack.c.l.b16 %v55
  %v152 = vunpack.c.l.b16 %v56
  %v153 = vunpack.c.l.b16 %v57
  %v154 = vunpack.c.l.b16 %v58
  %v155 = vunpack.c.l.b16 %v59
  %v156 = vunpack.c.l.b16 %v60
  %v157 = vunpack.c.l.b16 %v61
  %v158 = vunpack.c.l.b16 %v62
  %v159 = vunpack.c.l.b16 %v63
  %v160 = vunpack.c.l.b16 %v64
  %v161 = vunpack.c.l.b16 %v65
  %v162 = vunpack.c.l.b16 %v66
  %v163 = vunpack.c.l.b16 %v67
  %v164 = vunpack.c.l.b16 %v68
  %v165 = vunpack.c.l.b16 %v69
  %v166 = vunpack.c.l.b16 %v70
  %v167 = vunpack.c.l.b16 %v71
  %v168 = vunpack.c.l.b16 %v72
  %v169 = vunpack.c.l.b16 %v73
  %v170 = vunpack.c.l.b16 %v74
  %v171 = vunpack.c.l.b16 %v75
  %v172 = vunpack.c.l.b16 %v76
  %v173 = vunpack.c.l.b16 %v77
  %v174 = vunpack.c.l.b16 %v78
  %v175 = vunpack.c.l.b16 %v79
  %v176 = vunpack.c.l.b16 %v80
  %v177 = vunpack.c.l.b16 %v81
  %v178 = vunpack.c.l.b16 %v82
  %v179 = vunpack.c.l.b16 %v83
  %v180 = vunpack.c.l.b16 %v84
  %v181 = vunpack.c.l.b16 %v85
  %v182 = vunpack.c.l.b16 %v86
  %v183 = vunpack.c.l.b16 %v87
  %v184 = vunpack.c.l.b16 %v88
  %v185 = vunpack.c.l.b16 %v89
  %v186 = vunpack.c.l.b16 %v90
  %v187 = vunpack.c.l.b16 %v91
  %v188 = vunpack.c.l.b16 %v92
  %v189 = vpack.c.b16 %v142, %v141
  %v190 = vpack.c.b16 %v144, %v143
  %v191 = vpack.c.b16 %v146, %v145
  %v192 = vpack.c.b16 %v148, %v147
  %v193 = vpack.c.b16 %v150, %v149
  %v194 = vpack.c.b16 %v152, %v151
  %v195 = vpack.c.b16 %v154, %v153
  %v196 = vpack.c.b16 %v156, %v155
  %v197 = vpack.c.b16 %v158, %v157
  %v198 = vpack.c.b16 %v160, %v159
  %v199 = vpack.c.b16 %v162, %v161
  %v200 = vpack.c.b16 %v164, %v163
  %v201 = vpack.c.b16 %v166, %v165
  %v202 = vpack.c.b16 %v168, %v167
  %v203 = vpack.c.b16 %v170, %v169
  %v204 = vpack.c.b16 %v172, %v171
  %v205 = vpack.c.b16 %v174, %v173
  %v206 = vpack.c.b16 %v176, %v175
  %v207 = vpack.c.b16 %v178, %v177
  %v208 = vpack.c.b16 %v180, %v179
  %v209 = vpack.c.b16 %v182, %v181
  %v210 = vpack.c.b16 %v184, %v183
  %v211 = vpack.c.b16 %v186, %v185
  %v212 = vpack.c.b16 %v188, %v187
  %237 = vmatprep.subr.bf16.mxu0 0
  %238 = vmatpush1.bf16.msra.mxu0 %v189
  %239 = vmatprep.subr.bf16.mxu0 0
  %240 = vmatpush1.bf16.msra.mxu0 %v190
  %241 = vmatprep.subr.bf16.mxu0 0
  %242 = vmatpush1.bf16.msra.mxu0 %v191
  %243 = vmatprep.subr.bf16.mxu0 0
  %244 = vmatpush1.bf16.msra.mxu0 %v192
  %245 = vmatprep.subr.bf16.mxu0 0
  %246 = vmatpush1.bf16.msra.mxu0 %v193
  %247 = vmatprep.subr.bf16.mxu0 0
  %248 = vmatpush1.bf16.msra.mxu0 %v194
  %249 = vmatprep.subr.bf16.mxu0 0
  %250 = vmatpush1.bf16.msra.mxu0 %v195
  %251 = vmatprep.subr.bf16.mxu0 0
  %252 = vmatpush1.bf16.msra.mxu0 %v196
  %253 = vmatprep.subr.bf16.mxu0 0
  %254 = vmatpush1.bf16.msra.mxu0 %v197
  %255 = vmatprep.subr.bf16.mxu0 0
  %256 = vmatpush1.bf16.msra.mxu0 %v198
  %257 = vmatprep.subr.bf16.mxu0 0
  %258 = vmatpush1.bf16.msra.mxu0 %v199
  %259 = vmatprep.subr.bf16.mxu0 0
  %260 = vmatpush1.bf16.msra.mxu0 %v200
  %261 = vmatprep.subr.bf16.mxu0 0
  %262 = vmatpush1.bf16.msra.mxu0 %v201
  %263 = vmatprep.subr.bf16.mxu0 0
  %264 = vmatpush1.bf16.msra.mxu0 %v202
  %265 = vmatprep.subr.bf16.mxu0 0
  %266 = vmatpush1.bf16.msra.mxu0 %v203
  %267 = vmatprep.subr.bf16.mxu0 0
  %268 = vmatpush1.bf16.msra.mxu0 %v204
  %269 = vmatprep.mubr.bf16.mxu0 %v41
  %270 = vmatmul.mubr.bf16.gmra.mrb[0].mxu0 %v39
  %v271 = vpop.f32.mrb[0].mxu0
  %v272 = vadd.f32 0.0, %v271
  %v273 = vpop.f32.mrb[0].mxu0
  %v274 = vpop.f32.mrb[0].mxu0
  %v275 = vadd.f32 0.0, %v274
  %v276 = vpop.f32.mrb[0].mxu0
  %277 = vmatprep.mubr.bf16.mxu0 %v42
  %278 = vmatmul.mubr.bf16.gmra.mrb[0].mxu0 %v40
  %v279 = vpop.f32.mrb[0].mxu0
  %v280 = vadd.f32 0.0, %v279
  %v281 = vpop.f32.mrb[0].mxu0
  %v282 = vpop.f32.mrb[0].mxu0
  %v283 = vadd.f32 0.0, %v282
  %v284 = vpop.f32.mrb[0].mxu0
  %285 = vdwg.mxu0
  %286 = vmatprep.subr.bf16.mxu0 0
  %287 = vmatpush1.bf16.msra.mxu0 %v205
  %288 = vmatprep.subr.bf16.mxu0 0
  %289 = vmatpush1.bf16.msra.mxu0 %v206
  %290 = vmatprep.subr.bf16.mxu0 0
  %291 = vmatpush1.bf16.msra.mxu0 %v207
  %292 = vmatprep.subr.bf16.mxu0 0
  %293 = vmatpush1.bf16.msra.mxu0 %v208
  %294 = vmatprep.subr.bf16.mxu0 0
  %295 = vmatpush1.bf16.msra.mxu0 %v209
  %296 = vmatprep.subr.bf16.mxu0 0
  %297 = vmatpush1.bf16.msra.mxu0 %v210
  %298 = vmatprep.subr.bf16.mxu0 0
  %299 = vmatpush1.bf16.msra.mxu0 %v211
  %300 = vmatprep.subr.bf16.mxu0 0
  %301 = vmatpush1.bf16.msra.mxu0 %v212
  %302 = vmatprep.subr.bf16.mxu0 0
  %303 = vmatpush1.bf16.msra.mxu0 0
  %304 = vmatprep.subr.bf16.mxu0 0
  %305 = vmatpush1.bf16.msra.mxu0 0
  %306 = vmatprep.subr.bf16.mxu0 0
  %307 = vmatpush1.bf16.msra.mxu0 0
  %308 = vmatprep.subr.bf16.mxu0 0
  %309 = vmatpush1.bf16.msra.mxu0 0
  %310 = vmatprep.subr.bf16.mxu0 0
  %311 = vmatpush1.bf16.msra.mxu0 0
  %312 = vmatprep.subr.bf16.mxu0 0
  %313 = vmatpush1.bf16.msra.mxu0 0
  %314 = vmatprep.subr.bf16.mxu0 0
  %315 = vmatpush1.bf16.msra.mxu0 0
  %316 = vmatprep.subr.bf16.mxu0 0
  %317 = vmatpush1.bf16.msra.mxu0 0
  %318 = vmatprep.mubr.bf16.mxu0 0
  %319 = vmatmul.mubr.bf16.gmra.mrb[0].mxu0 %v43
  %v320 = vpop.f32.mrb[0].mxu0
  %v321 = vadd.f32 %v272, %v320
  %v322 = vpop.f32.mrb[0].mxu0
  %v323 = vpop.f32.mrb[0].mxu0
  %v324 = vadd.f32 %v275, %v323
  %v325 = vpop.f32.mrb[0].mxu0
  %326 = vmatprep.mubr.bf16.mxu0 0
  %327 = vmatmul.mubr.bf16.gmra.mrb[0].mxu0 %v44
  %v328 = vpop.f32.mrb[0].mxu0
  %v329 = vadd.f32 %v280, %v328
  %v330 = vpop.f32.mrb[0].mxu0
  %v331 = vpop.f32.mrb[0].mxu0
  %v332 = vadd.f32 %v283, %v331
  %v333 = vpop.f32.mrb[0].mxu0
  %334 = vdwg.mxu0
  %v335 = vld [vmem:[%s3] sm:$0x1]
  %v337 = vlaneseq
  %v338 = vshrl.u32 %v337, 7
  %v339 = vsub.s32 0, %v338
  %v340 = vrot.slane %v335, %v339
  %v342 = vmul.f32 %v321, %v340
  %v343 = vmul.f32 %v324, %v340
  %v344 = vmul.f32 %v329, %v340
  %v345 = vmul.f32 %v332, %v340
  %v346 = vld [vmem:[%s4] sm:$0x1]
  %v348 = vlaneseq
  %v349 = vshrl.u32 %v348, 7
  %v350 = vsub.s32 0, %v349
  %v351 = vrot.slane %v346, %v350
  %v353 = vadd.f32 %v342, %v351
  %v354 = vadd.f32 %v343, %v351
  %v355 = vadd.f32 %v344, %v351
  %v356 = vadd.f32 %v345, %v351
  %v357 = vmax.f32 %v353, 0.0
  %v358 = vmax.f32 %v354, 0.0
  %v359 = vmax.f32 %v355, 0.0
  %v360 = vmax.f32 %v356, 0.0
  %vm365 = vcmask 1040384
  %v366 = vrot.slane %v357, 7
  %v367 = vrot.slane %v358, 7
  %v368 = vsel %vm365, %v366, %v367
  %v369 = vrot.slane %v359, 7
  %v370 = vsel %vm365, %v367, %v369
  %v371 = vrot.slane %v360, 7
  %v372 = vsel %vm365, %v369, %v371
  %v377 = vsel %vm365, 0.0, %v366
  %vm378 = vcmask 1046528
  %v379 = vrot.slane %v357, 1
  %v380 = vrot.slane %v358, 1
  %v381 = vsel %vm378, %v379, %v380
  %v382 = vrot.slane %v359, 1
  %v383 = vsel %vm378, %v380, %v382
  %v384 = vrot.slane %v360, 1
  %v385 = vsel %vm378, %v382, %v384
  %v390 = vsel %vm378, %v384, 0.0
  %v391 = vlaneseq
  %v392 = vshrl.u32 %v391, 7
  %v393 = vadd.s32 %v392, 8
  %v394 = vadd.s32 %v392, 16
  %v395 = vadd.s32 %v392, 24
  %vm396 = vcmp.lt.s32.totalorder %v392, 0
  %v397 = vsub.s32 0, %v392
  %v398 = vsel %vm396, %v397, %v392
  %v399 = vshrl.u32 %v398, 4
  %v400 = vand.u32 %v398, 15
  %v401 = vsub.s32 0, %v400
  %v402 = vsel %vm396, %v401, %v400
  %vm403 = vcmp.lt.s32.totalorder %v393, 0
  %v404 = vsub.s32 0, %v393
  %v405 = vsel %vm403, %v404, %v393
  %v406 = vshrl.u32 %v405, 4
  %v407 = vand.u32 %v405, 15
  %v408 = vsub.s32 0, %v407
  %v409 = vsel %vm403, %v408, %v407
  %vm410 = vcmp.lt.s32.totalorder %v394, 0
  %v411 = vsub.s32 0, %v394
  %v412 = vsel %vm410, %v411, %v394
  %v413 = vshrl.u32 %v412, 4
  %v414 = vand.u32 %v412, 15
  %v415 = vsub.s32 0, %v414
  %v416 = vsel %vm410, %v415, %v414
  %vm417 = vcmp.lt.s32.totalorder %v395, 0
  %v418 = vsub.s32 0, %v395
  %v419 = vsel %vm417, %v418, %v395
  %v420 = vshrl.u32 %v419, 4
  %v421 = vand.u32 %v419, 15
  %v422 = vsub.s32 0, %v421
  %v423 = vsel %vm417, %v422, %v421
  %vm424 = vcmp.ne.s32.totalorder %v402, 0
  %vm425 = vcmp.ne.s32.totalorder %v409, 0
  %vm426 = vcmp.ne.s32.totalorder %v416, 0
  %vm427 = vcmp.ne.s32.totalorder %v423, 0
  %vm428 = vcmp.lt.s32.totalorder %v402, 0
  %vm429 = vcmp.lt.s32.totalorder %v409, 0
  %vm430 = vcmp.lt.s32.totalorder %v416, 0
  %vm431 = vcmp.lt.s32.totalorder %v423, 0
  %vm432 = vmand %vm428, %vm424
  %vm433 = vmand %vm429, %vm425
  %vm434 = vmand %vm430, %vm426
  %vm435 = vmand %vm431, %vm427
  %v436 = vadd.s32 %v402, 16
  %v437 = vadd.s32 %v409, 16
  %v438 = vadd.s32 %v416, 16
  %v439 = vadd.s32 %v423, 16
  %v440 = vsel %vm432, %v436, %v402
  %v441 = vsel %vm433, %v437, %v409
  %v442 = vsel %vm434, %v438, %v416
  %v443 = vsel %vm435, %v439, %v423
  %vm444 = vcmp.eq.s32.totalorder %v440, 0
  %vm445 = vcmp.eq.s32.totalorder %v441, 0
  %vm446 = vcmp.eq.s32.totalorder %v442, 0
  %vm447 = vcmp.eq.s32.totalorder %v443, 0
  %v448 = vsel %vm444, 1, 0
  %v449 = vsel %vm445, 1, 0
  %v450 = vsel %vm446, 1, 0
  %v451 = vsel %vm447, 1, 0
  %vm452 = vcmp.eq.s32.totalorder %v448, 1
  %vm453 = vcmp.eq.s32.totalorder %v449, 1
  %vm454 = vcmp.eq.s32.totalorder %v450, 1
  %vm455 = vcmp.eq.s32.totalorder %v451, 1
  %v456 = vsel %vm452, 0.0, %v377
  %v457 = vsel %vm453, 0.0, %v368
  %v458 = vsel %vm454, 0.0, %v370
  %v459 = vsel %vm455, 0.0, %v372
  %vm460 = vcmp.eq.s32.totalorder %v440, 15
  %vm461 = vcmp.eq.s32.totalorder %v441, 15
  %vm462 = vcmp.eq.s32.totalorder %v442, 15
  %vm463 = vcmp.eq.s32.totalorder %v443, 15
  %v464 = vsel %vm460, 1, 0
  %v465 = vsel %vm461, 1, 0
  %v466 = vsel %vm462, 1, 0
  %v467 = vsel %vm463, 1, 0
  %vm468 = vcmp.eq.s32.totalorder %v464, 1
  %vm469 = vcmp.eq.s32.totalorder %v465, 1
  %vm470 = vcmp.eq.s32.totalorder %v466, 1
  %vm471 = vcmp.eq.s32.totalorder %v467, 1
  %v472 = vsel %vm468, 0.0, %v381
  %v473 = vsel %vm469, 0.0, %v383
  %v474 = vsel %vm470, 0.0, %v385
  %v475 = vsel %vm471, 0.0, %v390
  %v476 = vpack.c.bf16 %v457, %v456
  %v477 = vpack.c.bf16 %v459, %v458
  %v478 = vpack.c.bf16 %v358, %v357
  %v479 = vpack.c.bf16 %v360, %v359
  %v480 = vpack.c.bf16 %v473, %v472
  %v481 = vpack.c.bf16 %v475, %v474
  %v482 = vld [vmem:[%s2] sm:$0xf]
  %v483 = vld [vmem:[%s2 + $0x4] sm:$0xf]
  %v484 = vld [vmem:[%s2 + $0x8] sm:$0xf]
  %v485 = vld [vmem:[%s2 + $0xc] sm:$0xf]
  %v486 = vld [vmem:[%s2 + $0x10] sm:$0xf]
  %v487 = vld [vmem:[%s2 + $0x14] sm:$0xf]
  %v488 = vld [vmem:[%s2 + $0x18] sm:$0xf]
  %v489 = vld [vmem:[%s2 + $0x1c] sm:$0xf]
  %v490 = vld [vmem:[%s2 + $0x20] sm:$0xf]
  %v491 = vld [vmem:[%s2 + $0x24] sm:$0xf]
  %v492 = vld [vmem:[%s2 + $0x28] sm:$0xf]
  %v493 = vld [vmem:[%s2 + $0x2c] sm:$0xf]
  %v494 = vld [vmem:[%s2 + $0x30] sm:$0xf]
  %v495 = vld [vmem:[%s2 + $0x34] sm:$0xf]
  %v496 = vld [vmem:[%s2 + $0x38] sm:$0xf]
  %v497 = vld [vmem:[%s2 + $0x3c] sm:$0xf]
  %v498 = vld [vmem:[%s2 + $0x40] sm:$0xf]
  %v499 = vld [vmem:[%s2 + $0x44] sm:$0xf]
  %v500 = vld [vmem:[%s2 + $0x48] sm:$0xf]
  %v501 = vld [vmem:[%s2 + $0x4c] sm:$0xf]
  %v502 = vld [vmem:[%s2 + $0x50] sm:$0xf]
  %v503 = vld [vmem:[%s2 + $0x54] sm:$0xf]
  %v504 = vld [vmem:[%s2 + $0x58] sm:$0xf]
  %v505 = vld [vmem:[%s2 + $0x5c] sm:$0xf]
  %v506 = vld [vmem:[%s2 + $0x60] sm:$0xf]
  %v507 = vld [vmem:[%s2 + $0x64] sm:$0xf]
  %v508 = vld [vmem:[%s2 + $0x68] sm:$0xf]
  %v509 = vld [vmem:[%s2 + $0x6c] sm:$0xf]
  %v510 = vld [vmem:[%s2 + $0x70] sm:$0xf]
  %v511 = vld [vmem:[%s2 + $0x74] sm:$0xf]
  %v512 = vld [vmem:[%s2 + $0x78] sm:$0xf]
  %v513 = vld [vmem:[%s2 + $0x7c] sm:$0xf]
  %v514 = vld [vmem:[%s2 + $0x80] sm:$0xf]
  %v515 = vld [vmem:[%s2 + $0x84] sm:$0xf]
  %v516 = vld [vmem:[%s2 + $0x88] sm:$0xf]
  %v517 = vld [vmem:[%s2 + $0x8c] sm:$0xf]
  %v518 = vld [vmem:[%s2 + $0x90] sm:$0xf]
  %v519 = vld [vmem:[%s2 + $0x94] sm:$0xf]
  %v520 = vld [vmem:[%s2 + $0x98] sm:$0xf]
  %v521 = vld [vmem:[%s2 + $0x9c] sm:$0xf]
  %v522 = vld [vmem:[%s2 + $0xa0] sm:$0xf]
  %v523 = vld [vmem:[%s2 + $0xa4] sm:$0xf]
  %v524 = vld [vmem:[%s2 + $0xa8] sm:$0xf]
  %v525 = vld [vmem:[%s2 + $0xac] sm:$0xf]
  %v526 = vld [vmem:[%s2 + $0xb0] sm:$0xf]
  %v527 = vld [vmem:[%s2 + $0xb4] sm:$0xf]
  %v528 = vld [vmem:[%s2 + $0xb8] sm:$0xf]
  %v529 = vld [vmem:[%s2 + $0xbc] sm:$0xf]
  %v578 = vunpack.c.l.b16 %v482
  %v579 = vunpack.c.l.b16 %v483
  %v580 = vunpack.c.l.b16 %v484
  %v581 = vunpack.c.l.b16 %v485
  %v582 = vunpack.c.l.b16 %v486
  %v583 = vunpack.c.l.b16 %v487
  %v584 = vunpack.c.l.b16 %v488
  %v585 = vunpack.c.l.b16 %v489
  %v586 = vunpack.c.l.b16 %v490
  %v587 = vunpack.c.l.b16 %v491
  %v588 = vunpack.c.l.b16 %v492
  %v589 = vunpack.c.l.b16 %v493
  %v590 = vunpack.c.l.b16 %v494
  %v591 = vunpack.c.l.b16 %v495
  %v592 = vunpack.c.l.b16 %v496
  %v593 = vunpack.c.l.b16 %v497
  %v594 = vunpack.c.l.b16 %v498
  %v595 = vunpack.c.l.b16 %v499
  %v596 = vunpack.c.l.b16 %v500
  %v597 = vunpack.c.l.b16 %v501
  %v598 = vunpack.c.l.b16 %v502
  %v599 = vunpack.c.l.b16 %v503
  %v600 = vunpack.c.l.b16 %v504
  %v601 = vunpack.c.l.b16 %v505
  %v602 = vunpack.c.l.b16 %v506
  %v603 = vunpack.c.l.b16 %v507
  %v604 = vunpack.c.l.b16 %v508
  %v605 = vunpack.c.l.b16 %v509
  %v606 = vunpack.c.l.b16 %v510
  %v607 = vunpack.c.l.b16 %v511
  %v608 = vunpack.c.l.b16 %v512
  %v609 = vunpack.c.l.b16 %v513
  %v610 = vunpack.c.l.b16 %v514
  %v611 = vunpack.c.l.b16 %v515
  %v612 = vunpack.c.l.b16 %v516
  %v613 = vunpack.c.l.b16 %v517
  %v614 = vunpack.c.l.b16 %v518
  %v615 = vunpack.c.l.b16 %v519
  %v616 = vunpack.c.l.b16 %v520
  %v617 = vunpack.c.l.b16 %v521
  %v618 = vunpack.c.l.b16 %v522
  %v619 = vunpack.c.l.b16 %v523
  %v620 = vunpack.c.l.b16 %v524
  %v621 = vunpack.c.l.b16 %v525
  %v622 = vunpack.c.l.b16 %v526
  %v623 = vunpack.c.l.b16 %v527
  %v624 = vunpack.c.l.b16 %v528
  %v625 = vunpack.c.l.b16 %v529
  %v626 = vpack.c.b16 %v579, %v578
  %v627 = vpack.c.b16 %v581, %v580
  %v628 = vpack.c.b16 %v583, %v582
  %v629 = vpack.c.b16 %v585, %v584
  %v630 = vpack.c.b16 %v587, %v586
  %v631 = vpack.c.b16 %v589, %v588
  %v632 = vpack.c.b16 %v591, %v590
  %v633 = vpack.c.b16 %v593, %v592
  %v634 = vpack.c.b16 %v595, %v594
  %v635 = vpack.c.b16 %v597, %v596
  %v636 = vpack.c.b16 %v599, %v598
  %v637 = vpack.c.b16 %v601, %v600
  %v638 = vpack.c.b16 %v603, %v602
  %v639 = vpack.c.b16 %v605, %v604
  %v640 = vpack.c.b16 %v607, %v606
  %v641 = vpack.c.b16 %v609, %v608
  %v642 = vpack.c.b16 %v611, %v610
  %v643 = vpack.c.b16 %v613, %v612
  %v644 = vpack.c.b16 %v615, %v614
  %v645 = vpack.c.b16 %v617, %v616
  %v646 = vpack.c.b16 %v619, %v618
  %v647 = vpack.c.b16 %v621, %v620
  %v648 = vpack.c.b16 %v623, %v622
  %v649 = vpack.c.b16 %v625, %v624
  %674 = vmatprep.subr.bf16.mxu0 0
  %675 = vmatpush1.bf16.msra.mxu0 %v626
  %676 = vmatprep.subr.bf16.mxu0 0
  %677 = vmatpush1.bf16.msra.mxu0 %v627
  %678 = vmatprep.subr.bf16.mxu0 0
  %679 = vmatpush1.bf16.msra.mxu0 %v628
  %680 = vmatprep.subr.bf16.mxu0 0
  %681 = vmatpush1.bf16.msra.mxu0 %v629
  %682 = vmatprep.subr.bf16.mxu0 0
  %683 = vmatpush1.bf16.msra.mxu0 %v630
  %684 = vmatprep.subr.bf16.mxu0 0
  %685 = vmatpush1.bf16.msra.mxu0 %v631
  %686 = vmatprep.subr.bf16.mxu0 0
  %687 = vmatpush1.bf16.msra.mxu0 %v632
  %688 = vmatprep.subr.bf16.mxu0 0
  %689 = vmatpush1.bf16.msra.mxu0 %v633
  %690 = vmatprep.subr.bf16.mxu0 0
  %691 = vmatpush1.bf16.msra.mxu0 %v634
  %692 = vmatprep.subr.bf16.mxu0 0
  %693 = vmatpush1.bf16.msra.mxu0 %v635
  %694 = vmatprep.subr.bf16.mxu0 0
  %695 = vmatpush1.bf16.msra.mxu0 %v636
  %696 = vmatprep.subr.bf16.mxu0 0
  %697 = vmatpush1.bf16.msra.mxu0 %v637
  %698 = vmatprep.subr.bf16.mxu0 0
  %699 = vmatpush1.bf16.msra.mxu0 %v638
  %700 = vmatprep.subr.bf16.mxu0 0
  %701 = vmatpush1.bf16.msra.mxu0 %v639
  %702 = vmatprep.subr.bf16.mxu0 0
  %703 = vmatpush1.bf16.msra.mxu0 %v640
  %704 = vmatprep.subr.bf16.mxu0 0
  %705 = vmatpush1.bf16.msra.mxu0 %v641
  %706 = vmatprep.mubr.bf16.mxu0 %v478
  %707 = vmatmul.mubr.bf16.gmra.mrb[0].mxu0 %v476
  %v708 = vpop.f32.mrb[0].mxu0
  %v709 = vadd.f32 0.0, %v708
  %v710 = vpop.f32.mrb[0].mxu0
  %v711 = vpop.f32.mrb[0].mxu0
  %v712 = vadd.f32 0.0, %v711
  %v713 = vpop.f32.mrb[0].mxu0
  %714 = vmatprep.mubr.bf16.mxu0 %v479
  %715 = vmatmul.mubr.bf16.gmra.mrb[0].mxu0 %v477
  %v716 = vpop.f32.mrb[0].mxu0
  %v717 = vadd.f32 0.0, %v716
  %v718 = vpop.f32.mrb[0].mxu0
  %v719 = vpop.f32.mrb[0].mxu0
  %v720 = vadd.f32 0.0, %v719
  %v721 = vpop.f32.mrb[0].mxu0
  %722 = vdwg.mxu0
  %723 = vmatprep.subr.bf16.mxu0 0
  %724 = vmatpush1.bf16.msra.mxu0 %v642
  %725 = vmatprep.subr.bf16.mxu0 0
  %726 = vmatpush1.bf16.msra.mxu0 %v643
  %727 = vmatprep.subr.bf16.mxu0 0
  %728 = vmatpush1.bf16.msra.mxu0 %v644
  %729 = vmatprep.subr.bf16.mxu0 0
  %730 = vmatpush1.bf16.msra.mxu0 %v645
  %731 = vmatprep.subr.bf16.mxu0 0
  %732 = vmatpush1.bf16.msra.mxu0 %v646
  %733 = vmatprep.subr.bf16.mxu0 0
  %734 = vmatpush1.bf16.msra.mxu0 %v647
  %735 = vmatprep.subr.bf16.mxu0 0
  %736 = vmatpush1.bf16.msra.mxu0 %v648
  %737 = vmatprep.subr.bf16.mxu0 0
  %738 = vmatpush1.bf16.msra.mxu0 %v649
  %739 = vmatprep.subr.bf16.mxu0 0
  %740 = vmatpush1.bf16.msra.mxu0 0
  %741 = vmatprep.subr.bf16.mxu0 0
  %742 = vmatpush1.bf16.msra.mxu0 0
  %743 = vmatprep.subr.bf16.mxu0 0
  %744 = vmatpush1.bf16.msra.mxu0 0
  %745 = vmatprep.subr.bf16.mxu0 0
  %746 = vmatpush1.bf16.msra.mxu0 0
  %747 = vmatprep.subr.bf16.mxu0 0
  %748 = vmatpush1.bf16.msra.mxu0 0
  %749 = vmatprep.subr.bf16.mxu0 0
  %750 = vmatpush1.bf16.msra.mxu0 0
  %751 = vmatprep.subr.bf16.mxu0 0
  %752 = vmatpush1.bf16.msra.mxu0 0
  %753 = vmatprep.subr.bf16.mxu0 0
  %754 = vmatpush1.bf16.msra.mxu0 0
  %755 = vmatprep.mubr.bf16.mxu0 0
  %756 = vmatmul.mubr.bf16.gmra.mrb[0].mxu0 %v480
  %v757 = vpop.f32.mrb[0].mxu0
  %v758 = vadd.f32 %v709, %v757
  %v759 = vpop.f32.mrb[0].mxu0
  %v760 = vpop.f32.mrb[0].mxu0
  %v761 = vadd.f32 %v712, %v760
  %v762 = vpop.f32.mrb[0].mxu0
  %763 = vmatprep.mubr.bf16.mxu0 0
  %764 = vmatmul.mubr.bf16.gmra.mrb[0].mxu0 %v481
  %v765 = vpop.f32.mrb[0].mxu0
  %v766 = vadd.f32 %v717, %v765
  %v767 = vpop.f32.mrb[0].mxu0
  %v768 = vpop.f32.mrb[0].mxu0
  %v769 = vadd.f32 %v720, %v768
  %v770 = vpop.f32.mrb[0].mxu0
  %771 = vdwg.mxu0
  %v772 = vld [vmem:[%s5] sm:$0x1]
  %v774 = vlaneseq
  %v775 = vshrl.u32 %v774, 7
  %v776 = vsub.s32 0, %v775
  %v777 = vrot.slane %v772, %v776
  %v779 = vmul.f32 %v758, %v777
  %v780 = vmul.f32 %v761, %v777
  %v781 = vmul.f32 %v766, %v777
  %v782 = vmul.f32 %v769, %v777
  %v783 = vld [vmem:[%s6] sm:$0x1]
  %v785 = vlaneseq
  %v786 = vshrl.u32 %v785, 7
  %v787 = vsub.s32 0, %v786
  %v788 = vrot.slane %v783, %v787
  %v790 = vadd.f32 %v779, %v788
  %v791 = vadd.f32 %v780, %v788
  %v792 = vadd.f32 %v781, %v788
  %v793 = vadd.f32 %v782, %v788
  %v794 = vmax.f32 %v790, 0.0
  %v795 = vmax.f32 %v791, 0.0
  %v796 = vmax.f32 %v792, 0.0
  %v797 = vmax.f32 %v793, 0.0
  %v798 = vadd.f32 %v794, %v31
  %v799 = vadd.f32 %v795, %v32
  %v800 = vadd.f32 %v796, %v33
  %v801 = vadd.f32 %v797, %v34
  %v802 = vmax.f32 %v798, 0.0
  %v803 = vmax.f32 %v799, 0.0
  %v804 = vmax.f32 %v800, 0.0
  %v805 = vmax.f32 %v801, 0.0
  %806 = vst [vmem:[%s7] sm:$0xff] %v802
  %807 = vst [vmem:[%s7 + $0x8] sm:$0xff] %v803
  %808 = vst [vmem:[%s7 + $0x10] sm:$0xff] %v804
  %809 = vst [vmem:[%s7 + $0x18] sm:$0xff] %v805
  // Predicated region
  $region30: #{basic_block_forward.1} parent=0 // pred_check
    _
  $region31: #{basic_block_forward.1} parent=0 // pred_check_branch
    %811 = sbr.rel (0) target = $region33
  $region32: #{basic_block_forward.1} parent=0 // pred_region
    _
  $region33: #{basic_block_forward.1} parent=0 // pred_fallthru
    _
  // Predicated region
  $region34: #{basic_block_forward.1} parent=0 // pred_check
    _
  $region35: #{basic_block_forward.1} parent=0 // pred_check_branch
    %813 = sbr.rel (0) target = $region37
  $region36: #{basic_block_forward.1} parent=0 // pred_region
    _
  $region37: #{basic_block_forward.1} parent=0 // pred_fallthru
    _

</llo_original>
